<compile_context>
chip_gen: v5e
topology: v5e:2x2
jax: 0.10.0
libtpu: 0.0.40
codegen_flags: <defaults>
</compile_context>

<pallas_src>
import functools

import jax
import jax.numpy as jnp
from jax.experimental import pallas as pl
from jax.experimental.pallas import tpu as pltpu

H = 64                                        # n_nodes (module default)
DROP_P = 0.2
_DROP_THRESHOLD_31 = int(DROP_P * (2 ** 31))  # compare vs. 31-bit uniform
_KEEP_SCALE = float(1.0 / (1.0 - DROP_P))     # inverted-dropout scale
_LANE = 128


def _round_up(x, m):
    return ((x + m - 1) // m) * m


def _uniform31(shape, seed_u32, row_off_u32):
    """Counter-based hash RNG (lowbias32 mix) -> int32 uniform in [0, 2^31).

    Uses only iota / integer mul / xor / shift, so it lowers both on TPU
    Mosaic (VPU) and in interpret mode.  Deterministic in (seed, global
    element index), hence independent of batch tiling.
    """
    rows = jax.lax.broadcasted_iota(jnp.uint32, shape, 0)
    cols = jax.lax.broadcasted_iota(jnp.uint32, shape, 1)
    x = (rows + row_off_u32) * jnp.uint32(shape[1]) + cols
    x = x + seed_u32 * jnp.uint32(0x9E3779B9)
    x = x ^ (x >> 16)
    x = x * jnp.uint32(0x7FEB352D)
    x = x ^ (x >> 15)
    x = x * jnp.uint32(0x846CA68B)
    x = x ^ (x >> 16)
    return (x & jnp.uint32(0x7FFFFFFF)).astype(jnp.int32)


def _decoder_kernel(seed_ref,                         # scalar-prefetch (SMEM)
                    x_ref, w0_ref, b0_ref,
                    w1_ref, b1_ref,
                    w2_ref, b2_ref,
                    o_ref,
                    *, training: bool):
    """Full MLP forward for one batch tile (n_layers=2 default)."""
    # Layer 0: Linear(in_dim, H) + ReLU  (f32 accumulate on the MXU)
    h = jnp.dot(x_ref[...], w0_ref[...], preferred_element_type=jnp.float32)
    h = jnp.maximum(h + b0_ref[...], 0.0)

    # Layer 1: Linear(H, H) + ReLU + Dropout(0.2)
    h = jnp.dot(h.astype(w1_ref.dtype), w1_ref[...],
                preferred_element_type=jnp.float32)
    h = jnp.maximum(h + b1_ref[...], 0.0)

    if training:
        # Train-mode inverted dropout.  Mask depends only on (seed, global
        # row, col), so it is identical regardless of grid order / megacore
        # assignment.  (Different RNG stream than torch, same distribution.)
        seed_u32 = seed_ref[0].astype(jnp.uint32)
        row_off = (pl.program_id(0) * h.shape[0]).astype(jnp.uint32)
        u31 = _uniform31(h.shape, seed_u32, row_off)
        keep = u31 >= jnp.int32(_DROP_THRESHOLD_31)   # P(keep) = 1 - DROP_P
        h = jnp.where(keep, h * _KEEP_SCALE, 0.0)

    # Output layer: Linear(H, out_dim_padded)  (lane-dense store)
    out = jnp.dot(h.astype(w2_ref.dtype), w2_ref[...],
                  preferred_element_type=jnp.float32)
    o_ref[...] = (out + b2_ref[...]).astype(o_ref.dtype)


def prepare_decoder_params(params, compute_dtype=jnp.float32):
    """One-time glue: transpose PyTorch (out,in) weights to (in,out), pad the
    output layer to a 128-lane multiple, and cast the streamed operands."""
    out_dim = params["w2"].shape[0]
    out_dim_p = _round_up(out_dim, _LANE)

    w0 = params["w0"].T.astype(compute_dtype)                     # (in_dim, H)
    b0 = params["b0"].reshape(1, H).astype(jnp.float32)
    w1 = params["w1"].T.astype(compute_dtype)                     # (H, H)
    b1 = params["b1"].reshape(1, H).astype(jnp.float32)
    w2 = jnp.zeros((H, out_dim_p), compute_dtype)
    w2 = w2.at[:, :out_dim].set(params["w2"].T.astype(compute_dtype))
    b2 = jnp.zeros((1, out_dim_p), jnp.float32)
    b2 = b2.at[:, :out_dim].set(params["b2"].astype(jnp.float32))

    return {"w0": w0, "b0": b0, "w1": w1, "b1": b1, "w2": w2, "b2": b2,
            "out_dim": out_dim, "compute_dtype": compute_dtype}


def _choose_block_b(B, in_dim, out_dim_p, in_itemsize, sublane):
    """Largest batch tile (multiple of the sublane granule, capped at 2048)
    whose double-buffered streaming tiles fit a v7x-safe VMEM budget."""
    per_row = 2 * (in_dim * in_itemsize + out_dim_p * 4) + 4 * H * 4
    budget = 12 * 1024 * 1024        # conservative: leaves headroom on v7x
    bb = min(2048, max(sublane, budget // max(per_row, 1)))
    bb = min(bb, _round_up(B, sublane))
    return max(sublane, (bb // sublane) * sublane)


def decoder_forward(x, prepared, seed=0, *, training=True, block_b=None):
    """x: (B, in_dim). prepared: output of prepare_decoder_params."""
    B, in_dim = x.shape
    cdtype = prepared["compute_dtype"]
    out_dim = prepared["out_dim"]
    out_dim_p = prepared["w2"].shape[1]
    in_isz = jnp.dtype(cdtype).itemsize
    sublane = 8 if in_isz >= 4 else 16          # f32 -> 8 rows, bf16 -> 16 rows

    if block_b is None:
        block_b = _choose_block_b(B, in_dim, out_dim_p, in_isz, sublane)
    block_b = max(sublane, (block_b // sublane) * sublane)

    # Pad the batch so any caller B works with the performance-optimal tile.
    B_pad = _round_up(B, block_b)
    xp = x.astype(cdtype)
    if B_pad != B:
        xp = jnp.pad(xp, ((0, B_pad - B), (0, 0)))

    grid = (B_pad // block_b,)

    # Scoped-VMEM sizing: resident weights (x2 slack) plus double-buffered
    # x/out tiles, with headroom; capped to stay safe on v7x (64 MiB/TC).
    w_bytes = sum(int(v.size) * v.dtype.itemsize
                  for k, v in prepared.items() if k[0] in ("w", "b"))
    tile_bytes = 2 * block_b * (in_dim * in_isz + out_dim_p * 4)
    vmem_limit = min(max(2 * w_bytes + tile_bytes + (8 << 20), 16 << 20),
                     48 << 20)

    kernel = functools.partial(_decoder_kernel, training=training)

    out = pl.pallas_call(
        kernel,
        out_shape=jax.ShapeDtypeStruct((B_pad, out_dim_p), jnp.float32),
        grid_spec=pltpu.PrefetchScalarGridSpec(
            num_scalar_prefetch=1,            # RNG seed lands in SMEM
            grid=grid,
            in_specs=[
                pl.BlockSpec((block_b, in_dim),  lambda i, s: (i, 0)),  # x
                pl.BlockSpec((in_dim, H),        lambda i, s: (0, 0)),  # w0
                pl.BlockSpec((1, H),             lambda i, s: (0, 0)),  # b0
                pl.BlockSpec((H, H),             lambda i, s: (0, 0)),  # w1
                pl.BlockSpec((1, H),             lambda i, s: (0, 0)),  # b1
                pl.BlockSpec((H, out_dim_p),     lambda i, s: (0, 0)),  # w2
                pl.BlockSpec((1, out_dim_p),     lambda i, s: (0, 0)),  # b2
            ],
            out_specs=pl.BlockSpec((block_b, out_dim_p), lambda i, s: (i, 0)),
        ),
        compiler_params=pltpu.CompilerParams(
            dimension_semantics=("parallel",),   # lets v7x use both TCs
            vmem_limit_bytes=int(vmem_limit)),
    )(jnp.array([seed], dtype=jnp.int32), xp,
      prepared["w0"], prepared["b0"], prepared["w1"], prepared["b1"],
      prepared["w2"], prepared["b2"])

    return out[:B, :out_dim]


def init_decoder_params(key, in_dim, out_dim):
    """PyTorch-Linear-style init: U(-1/sqrt(fan_in), +1/sqrt(fan_in))."""
    def linear(k, fan_out, fan_in):
        kw, kb = jax.random.split(k)
        bound = 1.0 / jnp.sqrt(fan_in)
        w = jax.random.uniform(kw, (fan_out, fan_in), jnp.float32, -bound, bound)
        b = jax.random.uniform(kb, (fan_out,), jnp.float32, -bound, bound)
        return w, b

    k0, k1, k2 = jax.random.split(key, 3)
    w0, b0 = linear(k0, H, in_dim)
    w1, b1 = linear(k1, H, H)
    w2, b2 = linear(k2, out_dim, H)
    return {"w0": w0, "b0": b0, "w1": w1, "b1": b1, "w2": w2, "b2": b2}


def decoder_reference_eval(x, params):
    """Pure-JAX reference (dropout disabled) for correctness cross-check."""
    h = jnp.maximum(x @ params["w0"].T + params["b0"], 0.0)
    h = jnp.maximum(h @ params["w1"].T + params["b1"], 0.0)
    return h @ params["w2"].T + params["b2"]


if __name__ == "__main__":
    # Small shapes consistent with the module's forward: x is (batch, in_dim).
    B, IN_DIM, OUT_DIM = 16, 32, 8

    key = jax.random.PRNGKey(0)
    kx, kp = jax.random.split(key)
    x = jax.random.normal(kx, (B, IN_DIM), jnp.float32)
    params = init_decoder_params(kp, IN_DIM, OUT_DIM)

    # f32 path: train-mode forward (dropout active, module default .train()).
    prep_f32 = prepare_decoder_params(params, jnp.float32)
    y_train = jax.block_until_ready(
        decoder_forward(x, prep_f32, seed=1234, training=True))
    assert y_train.shape == (B, OUT_DIM)
    assert bool(jnp.all(jnp.isfinite(y_train)))

    # Eval-mode forward (dropout = identity) vs pure-JAX reference, strict tol.
    y_eval = jax.block_until_ready(
        decoder_forward(x, prep_f32, seed=0, training=False))
    y_ref = decoder_reference_eval(x, params)
    assert jnp.allclose(y_eval, y_ref, atol=1e-5, rtol=1e-5)

    # bf16-streaming path (memory-bound optimization), f32 accumulate, loose tol.
    prep_bf16 = prepare_decoder_params(params, jnp.bfloat16)
    y_bf16 = jax.block_until_ready(
        decoder_forward(x, prep_bf16, seed=0, training=False))
    assert jnp.allclose(y_bf16, y_ref, atol=1e-1, rtol=1e-1)

    print("KERNEL_OK")
</pallas_src>

<mosaic_0001>
module attributes {stable_mosaic.version = 11 : i64} {
  func.func @_decoder_kernel(%arg0: i32, %arg1: memref<1xi32, #tpu.memory_space<smem>>, %arg2: memref<16x32xf32, #tpu.memory_space<vmem>>, %arg3: memref<32x64xf32, #tpu.memory_space<vmem>>, %arg4: memref<1x64xf32, #tpu.memory_space<vmem>>, %arg5: memref<64x64xf32, #tpu.memory_space<vmem>>, %arg6: memref<1x64xf32, #tpu.memory_space<vmem>>, %arg7: memref<64x128xf32, #tpu.memory_space<vmem>>, %arg8: memref<1x128xf32, #tpu.memory_space<vmem>>, %arg9: memref<16x128xf32, #tpu.memory_space<vmem>>) attributes {dimension_semantics = [#tpu.dimension_semantics<parallel>], iteration_bounds = array<i64: 1>, scalar_prefetch = 1 : i64, scratch_operands = 0 : i64, tpu.core_type = #tpu.core_type<tc>, window_params = [{transform_indices = @transform_0, window_bounds = array<i64: 16, 32>}, {pipeline_mode = #tpu.pipeline_mode<synchronous>, transform_indices = @transform_1, window_bounds = array<i64: 32, 64>}, {pipeline_mode = #tpu.pipeline_mode<synchronous>, transform_indices = @transform_2, window_bounds = array<i64: 1, 64>}, {pipeline_mode = #tpu.pipeline_mode<synchronous>, transform_indices = @transform_3, window_bounds = array<i64: 64, 64>}, {pipeline_mode = #tpu.pipeline_mode<synchronous>, transform_indices = @transform_4, window_bounds = array<i64: 1, 64>}, {pipeline_mode = #tpu.pipeline_mode<synchronous>, transform_indices = @transform_5, window_bounds = array<i64: 64, 128>}, {pipeline_mode = #tpu.pipeline_mode<synchronous>, transform_indices = @transform_6, window_bounds = array<i64: 1, 128>}, {transform_indices = @transform_7, window_bounds = array<i64: 16, 128>}]} {
    %c0 = arith.constant 0 : index
    %c0_0 = arith.constant 0 : index
    %0 = vector.load %arg2[%c0, %c0_0] : memref<16x32xf32, #tpu.memory_space<vmem>>, vector<16x32xf32>
    %c0_1 = arith.constant 0 : index
    %c0_2 = arith.constant 0 : index
    %1 = vector.load %arg3[%c0_1, %c0_2] : memref<32x64xf32, #tpu.memory_space<vmem>>, vector<32x64xf32>
    %cst = arith.constant dense<0.000000e+00> : vector<16x64xf32>
    %2 = tpu.matmul %0, %1, %cst {dimension_numbers = #tpu.dot_dimension_numbers<[1], [0], [0], [1], [0, 0, 1, 1], [], []>} : vector<16x32xf32>, vector<32x64xf32>, vector<16x64xf32> -> vector<16x64xf32>
    %c0_3 = arith.constant 0 : index
    %c0_4 = arith.constant 0 : index
    %3 = vector.load %arg4[%c0_3, %c0_4] : memref<1x64xf32, #tpu.memory_space<vmem>>, vector<1x64xf32>
    %4 = vector.broadcast %3 : vector<1x64xf32> to vector<16x64xf32>
    %5 = arith.addf %2, %4 : vector<16x64xf32>
    %cst_5 = arith.constant 0.000000e+00 : f32
    %6 = vector.broadcast %cst_5 : f32 to vector<16x64xf32>
    %7 = arith.maximumf %5, %6 : vector<16x64xf32>
    %c0_6 = arith.constant 0 : index
    %c0_7 = arith.constant 0 : index
    %8 = vector.load %arg5[%c0_6, %c0_7] : memref<64x64xf32, #tpu.memory_space<vmem>>, vector<64x64xf32>
    %cst_8 = arith.constant dense<0.000000e+00> : vector<16x64xf32>
    %9 = tpu.matmul %7, %8, %cst_8 {dimension_numbers = #tpu.dot_dimension_numbers<[1], [0], [0], [1], [0, 0, 1, 1], [], []>} : vector<16x64xf32>, vector<64x64xf32>, vector<16x64xf32> -> vector<16x64xf32>
    %c0_9 = arith.constant 0 : index
    %c0_10 = arith.constant 0 : index
    %10 = vector.load %arg6[%c0_9, %c0_10] : memref<1x64xf32, #tpu.memory_space<vmem>>, vector<1x64xf32>
    %11 = vector.broadcast %10 : vector<1x64xf32> to vector<16x64xf32>
    %12 = arith.addf %9, %11 : vector<16x64xf32>
    %cst_11 = arith.constant 0.000000e+00 : f32
    %13 = vector.broadcast %cst_11 : f32 to vector<16x64xf32>
    %14 = arith.maximumf %12, %13 : vector<16x64xf32>
    %c0_12 = arith.constant 0 : index
    %15 = memref.load %arg1[%c0_12] : memref<1xi32, #tpu.memory_space<smem>>
    %c16_i32 = arith.constant 16 : i32
    %16 = arith.muli %arg0, %c16_i32 : i32
    %17 = tpu.iota {dimensions = array<i32: 0>} : vector<16x64xi32>
    %18 = tpu.iota {dimensions = array<i32: 1>} : vector<16x64xi32>
    %19 = vector.broadcast %16 : i32 to vector<16x64xi32>
    %20 = arith.addi %17, %19 : vector<16x64xi32>
    %c64_i32 = arith.constant 64 : i32
    %21 = vector.broadcast %c64_i32 : i32 to vector<16x64xi32>
    %22 = arith.muli %20, %21 : vector<16x64xi32>
    %23 = arith.addi %22, %18 : vector<16x64xi32>
    %c-1640531527_i32 = arith.constant -1640531527 : i32
    %24 = arith.muli %15, %c-1640531527_i32 : i32
    %25 = vector.broadcast %24 : i32 to vector<16x64xi32>
    %26 = arith.addi %23, %25 : vector<16x64xi32>
    %c16_i32_13 = arith.constant 16 : i32
    %27 = vector.broadcast %c16_i32_13 : i32 to vector<16x64xi32>
    %28 = arith.shrui %26, %27 : vector<16x64xi32>
    %29 = arith.xori %26, %28 : vector<16x64xi32>
    %c2146121005_i32 = arith.constant 2146121005 : i32
    %30 = vector.broadcast %c2146121005_i32 : i32 to vector<16x64xi32>
    %31 = arith.muli %29, %30 : vector<16x64xi32>
    %c15_i32 = arith.constant 15 : i32
    %32 = vector.broadcast %c15_i32 : i32 to vector<16x64xi32>
    %33 = arith.shrui %31, %32 : vector<16x64xi32>
    %34 = arith.xori %31, %33 : vector<16x64xi32>
    %c-2073254261_i32 = arith.constant -2073254261 : i32
    %35 = vector.broadcast %c-2073254261_i32 : i32 to vector<16x64xi32>
    %36 = arith.muli %34, %35 : vector<16x64xi32>
    %c16_i32_14 = arith.constant 16 : i32
    %37 = vector.broadcast %c16_i32_14 : i32 to vector<16x64xi32>
    %38 = arith.shrui %36, %37 : vector<16x64xi32>
    %39 = arith.xori %36, %38 : vector<16x64xi32>
    %c2147483647_i32 = arith.constant 2147483647 : i32
    %40 = vector.broadcast %c2147483647_i32 : i32 to vector<16x64xi32>
    %41 = arith.andi %39, %40 : vector<16x64xi32>
    %c429496729_i32 = arith.constant 429496729 : i32
    %42 = vector.broadcast %c429496729_i32 : i32 to vector<16x64xi32>
    %43 = arith.cmpi sge, %41, %42 : vector<16x64xi32>
    %cst_15 = arith.constant 1.250000e+00 : f32
    %44 = vector.broadcast %cst_15 : f32 to vector<16x64xf32>
    %45 = arith.mulf %14, %44 : vector<16x64xf32>
    %cst_16 = arith.constant 0.000000e+00 : f32
    %46 = vector.broadcast %cst_16 : f32 to vector<16x64xf32>
    %47 = arith.select %43, %45, %46 : vector<16x64xi1>, vector<16x64xf32>
    %c0_17 = arith.constant 0 : index
    %c0_18 = arith.constant 0 : index
    %48 = vector.load %arg7[%c0_17, %c0_18] : memref<64x128xf32, #tpu.memory_space<vmem>>, vector<64x128xf32>
    %cst_19 = arith.constant dense<0.000000e+00> : vector<16x128xf32>
    %49 = tpu.matmul %47, %48, %cst_19 {dimension_numbers = #tpu.dot_dimension_numbers<[1], [0], [0], [1], [0, 0, 1, 1], [], []>} : vector<16x64xf32>, vector<64x128xf32>, vector<16x128xf32> -> vector<16x128xf32>
    %c0_20 = arith.constant 0 : index
    %c0_21 = arith.constant 0 : index
    %50 = vector.load %arg8[%c0_20, %c0_21] : memref<1x128xf32, #tpu.memory_space<vmem>>, vector<1x128xf32>
    %51 = vector.broadcast %50 : vector<1x128xf32> to vector<16x128xf32>
    %52 = arith.addf %49, %51 : vector<16x128xf32>
    %c0_22 = arith.constant 0 : index
    %c0_23 = arith.constant 0 : index
    %53 = vector.load %arg9[%c0_22, %c0_23] : memref<16x128xf32, #tpu.memory_space<vmem>>, vector<16x128xf32>
    tpu.vector_store %arg9[%c0_22, %c0_23], %52 {strides = array<i32>} : memref<16x128xf32, #tpu.memory_space<vmem>>, vector<16x128xf32>,
    return
  }
  func.func @transform_0(%arg0: i32, %arg1: memref<1xi32, #tpu.memory_space<smem>>) -> (i32, i32) {
    %c0_i32 = arith.constant 0 : i32
    %c0_i32_0 = arith.constant 0 : i32
    return %arg0, %c0_i32 : i32, i32
  }
  func.func @transform_1(%arg0: i32, %arg1: memref<1xi32, #tpu.memory_space<smem>>) -> (i32, i32) {
    %c0_i32 = arith.constant 0 : i32
    %c0_i32_0 = arith.constant 0 : i32
    %c0_i32_1 = arith.constant 0 : i32
    return %c0_i32, %c0_i32_0 : i32, i32
  }
  func.func @transform_2(%arg0: i32, %arg1: memref<1xi32, #tpu.memory_space<smem>>) -> (i32, i32) {
    %c0_i32 = arith.constant 0 : i32
    %c0_i32_0 = arith.constant 0 : i32
    %c0_i32_1 = arith.constant 0 : i32
    return %c0_i32, %c0_i32_0 : i32, i32
  }
  func.func @transform_3(%arg0: i32, %arg1: memref<1xi32, #tpu.memory_space<smem>>) -> (i32, i32) {
    %c0_i32 = arith.constant 0 : i32
    %c0_i32_0 = arith.constant 0 : i32
    %c0_i32_1 = arith.constant 0 : i32
    return %c0_i32, %c0_i32_0 : i32, i32
  }
  func.func @transform_4(%arg0: i32, %arg1: memref<1xi32, #tpu.memory_space<smem>>) -> (i32, i32) {
    %c0_i32 = arith.constant 0 : i32
    %c0_i32_0 = arith.constant 0 : i32
    %c0_i32_1 = arith.constant 0 : i32
    return %c0_i32, %c0_i32_0 : i32, i32
  }
  func.func @transform_5(%arg0: i32, %arg1: memref<1xi32, #tpu.memory_space<smem>>) -> (i32, i32) {
    %c0_i32 = arith.constant 0 : i32
    %c0_i32_0 = arith.constant 0 : i32
    %c0_i32_1 = arith.constant 0 : i32
    return %c0_i32, %c0_i32_0 : i32, i32
  }
  func.func @transform_6(%arg0: i32, %arg1: memref<1xi32, #tpu.memory_space<smem>>) -> (i32, i32) {
    %c0_i32 = arith.constant 0 : i32
    %c0_i32_0 = arith.constant 0 : i32
    %c0_i32_1 = arith.constant 0 : i32
    return %c0_i32, %c0_i32_0 : i32, i32
  }
  func.func @transform_7(%arg0: i32, %arg1: memref<1xi32, #tpu.memory_space<smem>>) -> (i32, i32) {
    %c0_i32 = arith.constant 0 : i32
    %c0_i32_0 = arith.constant 0 : i32
    return %arg0, %c0_i32 : i32, i32
  }
}

</mosaic_0001>

<llo_original>
// kernel: tpu_custom_call.1
$region0: #{tpu_custom_call.1}
  #allocation0 [shape = 'u32[]', space=smem, size = 0x4, offset = 0x4, fixed_abs, tag = 'smem constant byte address 0x4 - core index']
  #allocation1 [shape = 'u32[72,128]{1,0:T(1,128)}', space=vmem, size = 0x9000, scoped, tag = 'internal scratch']
  #allocation2 [shape = 's32[1]{0}', space=sflag, size = 0x4, scoped, tag = 'scoped memory for tpu_custom_call.1']
  #allocation3 [shape = 's32[1]{0:T(128)S(6)}', space=smem, size = 0x200, scoped, tag = 'prefetched SMEM operand 0']
  %s0 = inlined_call_operand.<no memory space> [shape: s32[1], index: 0, kind: input, shape index: {}]
  %s1 = inlined_call_operand.hbm [shape: f32[16,32], index: 1, kind: input, shape index: {}]
  %s2 = inlined_call_operand.hbm [shape: f32[32,64], index: 2, kind: input, shape index: {}]
  %s3 = inlined_call_operand.vmem [shape: f32[1,64], index: 3, kind: input, shape index: {}]
  %s4 = inlined_call_operand.hbm [shape: f32[64,64], index: 4, kind: input, shape index: {}]
  %s5 = inlined_call_operand.vmem [shape: f32[1,64], index: 5, kind: input, shape index: {}]
  %s6 = inlined_call_operand.hbm [shape: f32[64,128], index: 6, kind: input, shape index: {}]
  %s7 = inlined_call_operand.vmem [shape: f32[1,128], index: 7, kind: input, shape index: {}]
  %s8 = inlined_call_operand.hbm [shape: f32[16,128], index: 8, kind: output, shape index: {}]
  %s9 = sld [smem:[#allocation0]]
  $region54: #{tpu_custom_call.1} parent=0
    _
  %s11 = ssub.s32 1, %s9
  %s12 = scalar_select 0, %s11, %s9
  %13 = sst [smem:[#allocation3]] %s0
  $region1: #{tpu_custom_call.1} parent=0
    #allocation4 [shape = 'u8[8192]{0}', space=vmem, size = 0x2000, scoped, tag = 'input window, operand 1, single buffered']
    #allocation5 [shape = 's32[1]{0}', space=sflag, size = 0x4, scoped, tag = 'scoped memory for tpu_custom_call.1']
    #allocation6 [shape = 's32[1]{0}', space=sflag, size = 0x4, scoped, tag = 'scoped memory for tpu_custom_call.1']
    #allocation7 [shape = 'u8[16384]{0}', space=vmem, size = 0x4000, scoped, tag = 'input window, operand 2, single buffered']
    #allocation8 [shape = 's32[1]{0}', space=sflag, size = 0x4, scoped, tag = 'scoped memory for tpu_custom_call.1']
    #allocation9 [shape = 'u8[32768]{0}', space=vmem, size = 0x8000, scoped, tag = 'input window, operand 4, single buffered']
    #allocation10 [shape = 'u8[32768]{0}', space=vmem, size = 0x8000, scoped, tag = 'input window, operand 6, single buffered']
    #allocation11 [shape = 's32[1]{0}', space=sflag, size = 0x4, scoped, tag = 'scoped memory for tpu_custom_call.1']
    #allocation12 [shape = 'u8[8192]{0}', space=vmem, size = 0x2000, scoped, tag = 'output window, operand 0, single buffered']
    %14 = vsyncpa [#allocation5], 0
    %15 = vsyncpa [#allocation8], 0
    %16 = vsyncpa [#allocation11], 0
    %17 = vsyncpa [#allocation6], 0
    // Predicated region
    $region2: #{tpu_custom_call.1} parent=1 // pred_check
      _
    $region3: #{tpu_custom_call.1} parent=1 // pred_check_branch
      %19 = sbr.rel (0) target = $region5
    $region4: #{tpu_custom_call.1} parent=1 // pred_region
      %21 = vsyncadd [#allocation5], 0
      %s22 = sshll.u32 %s1, 4
      %s23 = int_to_ptr.hbm [resolvable:$true] %s22
      %s24 = sshll.u32 [#allocation4], 4
      %s25 = int_to_ptr.vmem [resolvable:$true] %s24
      %30 = dma.hbm_to_vmem [thread:$0]  %s23, 256, %s25, [#allocation5], 128, 128, 8
    $region5: #{tpu_custom_call.1} parent=1 // pred_fallthru
      _
    // Predicated region
    $region6: #{tpu_custom_call.1} parent=1 // pred_check
      _
    $region7: #{tpu_custom_call.1} parent=1 // pred_check_branch
      %32 = sbr.rel (0) target = $region9
    $region8: #{tpu_custom_call.1} parent=1 // pred_region
      %34 = vsyncadd [#allocation8], 0
      %s35 = sshll.u32 %s2, 4
      %s36 = int_to_ptr.hbm [resolvable:$true] %s35
      %s37 = sshll.u32 [#allocation7], 4
      %s38 = int_to_ptr.vmem [resolvable:$true] %s37
      %43 = dma.hbm_to_vmem [thread:$0]  %s36, 512, %s38, [#allocation8], 128, 128, 8
    $region9: #{tpu_custom_call.1} parent=1 // pred_fallthru
      _
    // Predicated region
    $region10: #{tpu_custom_call.1} parent=1 // pred_check
      _
    $region11: #{tpu_custom_call.1} parent=1 // pred_check_branch
      %45 = sbr.rel (0) target = $region13
    $region12: #{tpu_custom_call.1} parent=1 // pred_region
      _
    $region13: #{tpu_custom_call.1} parent=1 // pred_fallthru
      _
    // Predicated region
    $region14: #{tpu_custom_call.1} parent=1 // pred_check
      _
    $region15: #{tpu_custom_call.1} parent=1 // pred_check_branch
      %47 = sbr.rel (0) target = $region17
    $region16: #{tpu_custom_call.1} parent=1 // pred_region
      %49 = vsyncadd [#allocation8], 0
      %s50 = sshll.u32 %s4, 4
      %s51 = int_to_ptr.hbm [resolvable:$true] %s50
      %s52 = sshll.u32 [#allocation9], 4
      %s53 = int_to_ptr.vmem [resolvable:$true] %s52
      %58 = dma.hbm_to_vmem [thread:$0]  %s51, 1024, %s53, [#allocation8], 128, 128, 8
    $region17: #{tpu_custom_call.1} parent=1 // pred_fallthru
      _
    // Predicated region
    $region18: #{tpu_custom_call.1} parent=1 // pred_check
      _
    $region19: #{tpu_custom_call.1} parent=1 // pred_check_branch
      %60 = sbr.rel (0) target = $region21
    $region20: #{tpu_custom_call.1} parent=1 // pred_region
      _
    $region21: #{tpu_custom_call.1} parent=1 // pred_fallthru
      _
    // Predicated region
    $region22: #{tpu_custom_call.1} parent=1 // pred_check
      _
    $region23: #{tpu_custom_call.1} parent=1 // pred_check_branch
      %62 = sbr.rel (0) target = $region25
    $region24: #{tpu_custom_call.1} parent=1 // pred_region
      %64 = vsyncadd [#allocation11], 0
      %s65 = sshll.u32 %s6, 4
      %s66 = int_to_ptr.hbm [resolvable:$true] %s65
      %s67 = sshll.u32 [#allocation10], 4
      %s68 = int_to_ptr.vmem [resolvable:$true] %s67
      %73 = dma.hbm_to_vmem [thread:$0]  %s66, 1024, %s68, [#allocation11], 128, 128, 8
    $region25: #{tpu_custom_call.1} parent=1 // pred_fallthru
      _
    // Predicated region
    $region26: #{tpu_custom_call.1} parent=1 // pred_check
      _
    $region27: #{tpu_custom_call.1} parent=1 // pred_check_branch
      %75 = sbr.rel (0) target = $region29
    $region28: #{tpu_custom_call.1} parent=1 // pred_region
      _
    $region29: #{tpu_custom_call.1} parent=1 // pred_fallthru
      _
    // Predicated region
    $region30: #{tpu_custom_call.1} parent=1 // pred_check
      _
    $region31: #{tpu_custom_call.1} parent=1 // pred_check_branch
      %77 = sbr.rel (0) target = $region33
    $region32: #{tpu_custom_call.1} parent=1 // pred_region
      %79 = dma.done [#allocation5], 256
    $region33: #{tpu_custom_call.1} parent=1 // pred_fallthru
      _
    // Predicated region
    $region34: #{tpu_custom_call.1} parent=1 // pred_check
      _
    $region35: #{tpu_custom_call.1} parent=1 // pred_check_branch
      %81 = sbr.rel (0) target = $region37
    $region36: #{tpu_custom_call.1} parent=1 // pred_region
      %83 = dma.done [#allocation8], 512
    $region37: #{tpu_custom_call.1} parent=1 // pred_fallthru
      _
    // Predicated region
    $region38: #{tpu_custom_call.1} parent=1 // pred_check
      _
    $region39: #{tpu_custom_call.1} parent=1 // pred_check_branch
      %85 = sbr.rel (0) target = $region41
    $region40: #{tpu_custom_call.1} parent=1 // pred_region
      %87 = dma.done [#allocation8], 1024
    $region41: #{tpu_custom_call.1} parent=1 // pred_fallthru
      _
    // Predicated region
    $region42: #{tpu_custom_call.1} parent=1 // pred_check
      _
    $region43: #{tpu_custom_call.1} parent=1 // pred_check_branch
      %89 = sbr.rel (0) target = $region45
    $region44: #{tpu_custom_call.1} parent=1 // pred_region
      %91 = dma.done [#allocation11], 1024
    $region45: #{tpu_custom_call.1} parent=1 // pred_fallthru
      _
    %v92 = vld [vmem:[#allocation4] sm:$0xff]
    %v93 = vld [vmem:[#allocation4 + $0x8] sm:$0xff]
    %v94 = vld [vmem:[#allocation7] sm:$0xff]
    %v95 = vld [vmem:[#allocation7 + $0x8] sm:$0xff]
    %v96 = vld [vmem:[#allocation7 + $0x10] sm:$0xff]
    %v97 = vld [vmem:[#allocation7 + $0x18] sm:$0xff]
    %v98 = vld [vmem:[%s3] sm:$0x1]
    %v100 = vperm.slane %v98, 0
    %vm102 = vcmask 261120
    %v104 = vsel %vm102, %v92, 0
    %v107 = vsel %vm102, %v93, 0
    %109 = vmatpush.msra.mxu0 0.0
    %110 = vmatpush.msra.mxu0 0.0
    %111 = vmatpush.msra.mxu0 0.0
    %112 = vmatpush.msra.mxu0 0.0
    %113 = vmatpush.msra.mxu0 0.0
    %114 = vmatpush.msra.mxu0 0.0
    %115 = vmatpush.msra.mxu0 0.0
    %116 = vmatpush.msra.mxu0 0.0
    %117 = vmatpush.msra.mxu0 0.0
    %118 = vmatpush.msra.mxu0 0.0
    %119 = vmatpush.msra.mxu0 0.0
    %120 = vmatpush.msra.mxu0 0.0
    %121 = vmatpush.msra.mxu0 %v97
    %122 = vmatpush.msra.mxu0 %v96
    %123 = vmatpush.msra.mxu0 %v95
    %124 = vmatpush.msra.mxu0 %v94
    %125 = vmatmul.f32.gmra.mxu0 %v104
    %v126 = vpop.f32.mrf.mxu0
    %v127 = vadd.f32 %v100, %v126
    %128 = vmatmul.f32.gmra.mxu0 %v107
    %v129 = vpop.f32.mrf.mxu0
    %v130 = vadd.f32 %v100, %v129
    %131 = vdwg.mxu0
    %v132 = vmax.f32 %v127, 0.0
    %v133 = vmax.f32 %v130, 0.0
    %v134 = vld [vmem:[#allocation9] sm:$0xff]
    %v135 = vld [vmem:[#allocation9 + $0x8] sm:$0xff]
    %v136 = vld [vmem:[#allocation9 + $0x10] sm:$0xff]
    %v137 = vld [vmem:[#allocation9 + $0x18] sm:$0xff]
    %v138 = vld [vmem:[#allocation9 + $0x20] sm:$0xff]
    %v139 = vld [vmem:[#allocation9 + $0x28] sm:$0xff]
    %v140 = vld [vmem:[#allocation9 + $0x30] sm:$0xff]
    %v141 = vld [vmem:[#allocation9 + $0x38] sm:$0xff]
    %v142 = vld [vmem:[%s5] sm:$0x1]
    %v144 = vperm.slane %v142, 0
    %vm146 = vcmask 523264
    %v148 = vsel %vm146, %v132, 0
    %v151 = vsel %vm146, %v133, 0
    %153 = vmatpush.msra.mxu0 0.0
    %154 = vmatpush.msra.mxu0 0.0
    %155 = vmatpush.msra.mxu0 0.0
    %156 = vmatpush.msra.mxu0 0.0
    %157 = vmatpush.msra.mxu0 0.0
    %158 = vmatpush.msra.mxu0 0.0
    %159 = vmatpush.msra.mxu0 0.0
    %160 = vmatpush.msra.mxu0 0.0
    %161 = vmatpush.msra.mxu0 %v141
    %162 = vmatpush.msra.mxu0 %v140
    %163 = vmatpush.msra.mxu0 %v139
    %164 = vmatpush.msra.mxu0 %v138
    %165 = vmatpush.msra.mxu0 %v137
    %166 = vmatpush.msra.mxu0 %v136
    %167 = vmatpush.msra.mxu0 %v135
    %168 = vmatpush.msra.mxu0 %v134
    %169 = vmatmul.f32.gmra.mxu0 %v148
    %v170 = vpop.f32.mrf.mxu0
    %v171 = vadd.f32 %v144, %v170
    %172 = vmatmul.f32.gmra.mxu0 %v151
    %v173 = vpop.f32.mrf.mxu0
    %v174 = vadd.f32 %v144, %v173
    %175 = vdwg.mxu0
    %v176 = vmax.f32 %v171, 0.0
    %v177 = vmax.f32 %v174, 0.0
    %s178 = sld [smem:[#allocation3]]
    %s179 = smul.u32 0, 16
    %v180 = vlaneseq
    %v181 = vshrl.u32 %v180, 7
    %v182 = vadd.s32 %v181, 8
    %v183 = vlaneseq
    %v184 = vand.u32 %v183, 127
    %v185 = vstv %s179
    %v186 = vadd.s32 %v181, %v185
    %v187 = vadd.s32 %v182, %v185
    %v188 = vmul.u32 %v186, 64
    %v189 = vmul.u32 %v187, 64
    %v190 = vadd.s32 %v188, %v184
    %v191 = vadd.s32 %v189, %v184
    %s192 = smul.u32 %s178, 2654435769
    %v193 = vstv %s192
    %v194 = vadd.s32 %v190, %v193
    %v195 = vadd.s32 %v191, %v193
    %v196 = vshrl.u32 %v194, 16
    %v197 = vshrl.u32 %v195, 16
    %v198 = vxor.u32 %v194, %v196
    %v199 = vxor.u32 %v195, %v197
    %v200 = vmul.u32 %v198, 2146121005
    %v201 = vmul.u32 %v199, 2146121005
    %v202 = vshrl.u32 %v200, 15
    %v203 = vshrl.u32 %v201, 15
    %v204 = vxor.u32 %v200, %v202
    %v205 = vxor.u32 %v201, %v203
    %v206 = vmul.u32 %v204, 2221713035
    %v207 = vmul.u32 %v205, 2221713035
    %v208 = vshrl.u32 %v206, 16
    %v209 = vshrl.u32 %v207, 16
    %v210 = vxor.u32 %v206, %v208
    %v211 = vxor.u32 %v207, %v209
    %v212 = vand.u32 %v210, 2147483647
    %v213 = vand.u32 %v211, 2147483647
    %vm214 = vcmp.ge.s32.totalorder %v212, 429496729
    %vm215 = vcmp.ge.s32.totalorder %v213, 429496729
    %v216 = vmul.f32 %v176, 1.25
    %v217 = vmul.f32 %v177, 1.25
    %v218 = vsel %vm214, %v216, 0.0
    %v219 = vsel %vm215, %v217, 0.0
    %v220 = vld [vmem:[#allocation10] sm:$0xff]
    %v221 = vld [vmem:[#allocation10 + $0x8] sm:$0xff]
    %v222 = vld [vmem:[#allocation10 + $0x10] sm:$0xff]
    %v223 = vld [vmem:[#allocation10 + $0x18] sm:$0xff]
    %v224 = vld [vmem:[#allocation10 + $0x20] sm:$0xff]
    %v225 = vld [vmem:[#allocation10 + $0x28] sm:$0xff]
    %v226 = vld [vmem:[#allocation10 + $0x30] sm:$0xff]
    %v227 = vld [vmem:[#allocation10 + $0x38] sm:$0xff]
    %v228 = vld [vmem:[%s7] sm:$0x1]
    %v230 = vperm.slane %v228, 0
    %v233 = vsel %vm146, %v218, 0
    %v236 = vsel %vm146, %v219, 0
    %238 = vmatpush.msra.mxu0 0.0
    %239 = vmatpush.msra.mxu0 0.0
    %240 = vmatpush.msra.mxu0 0.0
    %241 = vmatpush.msra.mxu0 0.0
    %242 = vmatpush.msra.mxu0 0.0
    %243 = vmatpush.msra.mxu0 0.0
    %244 = vmatpush.msra.mxu0 0.0
    %245 = vmatpush.msra.mxu0 0.0
    %246 = vmatpush.msra.mxu0 %v227
    %247 = vmatpush.msra.mxu0 %v226
    %248 = vmatpush.msra.mxu0 %v225
    %249 = vmatpush.msra.mxu0 %v224
    %250 = vmatpush.msra.mxu0 %v223
    %251 = vmatpush.msra.mxu0 %v222
    %252 = vmatpush.msra.mxu0 %v221
    %253 = vmatpush.msra.mxu0 %v220
    %254 = vmatmul.f32.gmra.mxu0 %v233
    %v255 = vpop.f32.mrf.mxu0
    %v256 = vadd.f32 %v230, %v255
    %257 = vmatmul.f32.gmra.mxu0 %v236
    %v258 = vpop.f32.mrf.mxu0
    %v259 = vadd.f32 %v230, %v258
    %260 = vdwg.mxu0
    %261 = vst [vmem:[#allocation12] sm:$0xff] %v256
    %262 = vst [vmem:[#allocation12 + $0x8] sm:$0xff] %v259
    // Predicated region
    $region46: #{tpu_custom_call.1} parent=1 // pred_check
      _
    $region47: #{tpu_custom_call.1} parent=1 // pred_check_branch
      %264 = sbr.rel (0) target = $region49
    $region48: #{tpu_custom_call.1} parent=1 // pred_region
      %266 = vsyncadd [#allocation6], 0
      %s267 = sshll.u32 [#allocation12], 4
      %s268 = int_to_ptr.vmem [resolvable:$true] %s267
      %s269 = sshll.u32 %s8, 4
      %s270 = int_to_ptr.hbm [resolvable:$true] %s269
      %275 = dma.vmem_to_hbm [thread:$0]  %s268, 256, %s270, [#allocation6], 128, 128, 8
    $region49: #{tpu_custom_call.1} parent=1 // pred_fallthru
      _
    // Predicated region
    $region50: #{tpu_custom_call.1} parent=1 // pred_check
      _
    $region51: #{tpu_custom_call.1} parent=1 // pred_check_branch
      %277 = sbr.rel (0) target = $region53
    $region52: #{tpu_custom_call.1} parent=1 // pred_region
      %279 = dma.done [#allocation6], 256
    $region53: #{tpu_custom_call.1} parent=1 // pred_fallthru
      _
    %280 = vsyncpa [#allocation5], 1
    %281 = vsyncpa [#allocation8], 1
    %282 = vsyncpa [#allocation11], 1
    %283 = vsyncpa [#allocation6], 1

</llo_original>
